<compile_context>
chip_gen: v7x
topology: tpu7x:2x2x1
jax: 0.10.0
libtpu: 0.0.40
codegen_flags: <defaults>
</compile_context>

<pallas_src>
import math
import functools

import jax
import jax.numpy as jnp
from jax.experimental import pallas as pl
from jax.experimental.pallas import tpu as pltpu


_INV_SQRT2 = 1.0 / math.sqrt(2.0)


def _round_up(x: int, m: int) -> int:
    return ((x + m - 1) // m) * m


def _mlp_kernel(x_ref, w1_ref, w2_ref, o_ref, acc_ref):
    # x_ref : (tm, Ep)       row tile of activations (resident across k)
    # w1_ref: (Ep, th)       hidden-dim tile of W1^T
    # w2_ref: (th, Ep)       hidden-dim tile of W2^T
    # o_ref : (tm, Ep)       output row tile (written on last k step)
    # acc_ref: (tm, Ep) f32  accumulator scratch
    k = pl.program_id(1)

    @pl.when(k == 0)
    def _():
        acc_ref[...] = jnp.zeros_like(acc_ref)

    x = x_ref[...]
    # First matmul: (tm, Ep) @ (Ep, th) -> f32 on the MXU.
    h = jnp.dot(x, w1_ref[...], preferred_element_type=jnp.float32)
    # Exact erf-based GELU (matches torch.nn.GELU() default), in f32.
    h = 0.5 * h * (1.0 + jax.lax.erf(h * jnp.float32(_INV_SQRT2)))
    # Second matmul partial product, accumulated in f32.
    # NOTE: when the compute dtype is bf16 this rounds h to bf16 before the
    # second matmul (standard mixed-precision behavior, not in the f32 ref).
    acc_ref[...] += jnp.dot(h.astype(w2_ref.dtype), w2_ref[...],
                            preferred_element_type=jnp.float32)

    @pl.when(k == pl.num_programs(1) - 1)
    def _():
        # Dropout with p=0.0 is identity -> nothing else to do.
        o_ref[...] = acc_ref[...].astype(o_ref.dtype)


def _vmem_need(tm, th, Ep, isz, osz):
    # Double-buffered input/output tiles + f32 accumulator scratch.
    return (2 * tm * Ep * isz          # x row tile
            + 2 * Ep * th * isz        # W1^T tile
            + 2 * th * Ep * isz        # W2^T tile
            + 2 * tm * Ep * osz        # output tile
            + tm * Ep * 4)             # f32 accumulator


def _select_tiles(M, Ep, H, isz, osz, tm_req, th_req, budget):
    """Pick row/hidden tile sizes that respect the VMEM budget."""
    tm = max(8, min(_round_up(tm_req, 8), _round_up(M, 8)))
    th = max(128, min(_round_up(th_req, 128), _round_up(H, 128)))
    # Shrink the hidden tile first (cheap: only shortens the reduction step),
    # then the row tile, until the working set fits.
    while _vmem_need(tm, th, Ep, isz, osz) > budget and th > 128:
        th = max(128, th // 2)
    while _vmem_need(tm, th, Ep, isz, osz) > budget and tm > 8:
        tm = max(8, tm // 2)
    return tm, th


@functools.partial(jax.jit, static_argnames=("tm", "th", "compute_dtype"))
def mlp_forward(x, w1, w2, *, tm=256, th=512, compute_dtype=None):
    """Fused MLP forward.

    x : (B, T, n_embd)
    w1: (n_hidden, n_embd)  -- residual_fc.weight         (PyTorch layout)
    w2: (n_embd, n_hidden)  -- residual_projection.weight (PyTorch layout)
    compute_dtype: dtype for the matmul inputs (e.g. jnp.bfloat16);
                   accumulation is always f32, output keeps x.dtype.
    """
    B, T, E = x.shape
    H = w1.shape[0]
    out_dtype = x.dtype
    cdt = compute_dtype if compute_dtype is not None else x.dtype

    M = B * T
    x2d = x.reshape(M, E).astype(cdt)
    w1t = jnp.transpose(w1).astype(cdt)   # (E, H)
    w2t = jnp.transpose(w2).astype(cdt)   # (H, E)

    # ---- pad to TPU-friendly tile multiples (lane=128, sublane=8) ----------
    Ep = _round_up(E, 128)
    isz = jnp.dtype(cdt).itemsize
    osz = jnp.dtype(out_dtype).itemsize

    # Conservative working-set budget: fits comfortably in v7x's 64 MiB VMEM.
    budget = 48 << 20
    tm_eff, th_eff = _select_tiles(M, Ep, H, isz, osz, tm, th, budget)

    Mp = _round_up(M, tm_eff)
    Hp = _round_up(H, th_eff)

    if (Mp != M) or (Ep != E):
        x2d = jnp.pad(x2d, ((0, Mp - M), (0, Ep - E)))
    if (Ep != E) or (Hp != H):
        w1t = jnp.pad(w1t, ((0, Ep - E), (0, Hp - H)))
        w2t = jnp.pad(w2t, ((0, Hp - H), (0, Ep - E)))

    grid = (Mp // tm_eff, Hp // th_eff)

    vmem_need = _vmem_need(tm_eff, th_eff, Ep, isz, osz)
    vmem_limit = int(min(max(vmem_need + (8 << 20), 16 << 20), 60 << 20))

    cost = pl.CostEstimate(
        flops=4 * Mp * Ep * Hp,             # two matmuls: 2*M*E*H each
        transcendentals=Mp * Hp,            # erf per hidden activation
        bytes_accessed=(Mp * Ep * isz + Ep * Hp * isz
                        + Hp * Ep * isz + Mp * Ep * osz),
    )

    out2d = pl.pallas_call(
        _mlp_kernel,
        out_shape=jax.ShapeDtypeStruct((Mp, Ep), out_dtype),
        grid_spec=pltpu.PrefetchScalarGridSpec(
            num_scalar_prefetch=0,
            grid=grid,
            in_specs=[
                pl.BlockSpec((tm_eff, Ep), lambda i, k: (i, 0)),   # x rows
                pl.BlockSpec((Ep, th_eff), lambda i, k: (0, k)),   # W1^T tile
                pl.BlockSpec((th_eff, Ep), lambda i, k: (k, 0)),   # W2^T tile
            ],
            out_specs=pl.BlockSpec((tm_eff, Ep), lambda i, k: (i, 0)),
            scratch_shapes=[pltpu.VMEM((tm_eff, Ep), jnp.float32)],
        ),
        compiler_params=pltpu.CompilerParams(
            dimension_semantics=("parallel", "arbitrary"),
            vmem_limit_bytes=vmem_limit,
        ),
        cost_estimate=cost,
    )(x2d, w1t, w2t)

    return out2d[:M, :E].reshape(B, T, E)


def _reference(x, w1, w2):
    h = jnp.einsum("bte,he->bth", x, w1)
    h = jax.nn.gelu(h, approximate=False)
    return jnp.einsum("bth,eh->bte", h, w2)


if __name__ == "__main__":
    # Small shapes consistent with the module: batch=2, seq=8, n_embd=32,
    # n_hidden = 4 * n_embd (GPT-2 default), dropout=0.0, bias=False.
    B, T, n_embd = 2, 8, 32
    n_hidden = 4 * n_embd

    key = jax.random.PRNGKey(0)
    kx, k1, k2 = jax.random.split(key, 3)

    x = jax.random.normal(kx, (B, T, n_embd), dtype=jnp.float32)
    # Weights in the same (out_features, in_features) layout as nn.Linear.
    w1 = jax.random.normal(k1, (n_hidden, n_embd), dtype=jnp.float32) * 0.02
    w2 = jax.random.normal(k2, (n_embd, n_hidden), dtype=jnp.float32) * 0.02

    y_ref = _reference(x, w1, w2)

    # f32 compute path: matches the PyTorch module numerics (erf GELU).
    y32 = mlp_forward(x, w1, w2)
    jax.block_until_ready(y32)
    assert y32.shape == (B, T, n_embd)
    assert jnp.allclose(y32, y_ref, atol=1e-5, rtol=1e-5)

    # bf16 compute path (f32 accumulation): the production-speed config.
    ybf16 = mlp_forward(x, w1, w2, compute_dtype=jnp.bfloat16)
    jax.block_until_ready(ybf16)
    assert ybf16.shape == (B, T, n_embd)
    assert jnp.allclose(ybf16.astype(jnp.float32), y_ref, atol=5e-3, rtol=5e-2)

    print("KERNEL_OK")
</pallas_src>

<mosaic_0001>
module attributes {stable_mosaic.version = 11 : i64} {
  func.func @_mlp_kernel(%arg0: i32, %arg1: i32, %arg2: memref<16x128xf32, #tpu.memory_space<vmem>>, %arg3: memref<128x128xf32, #tpu.memory_space<vmem>>, %arg4: memref<128x128xf32, #tpu.memory_space<vmem>>, %arg5: memref<16x128xf32, #tpu.memory_space<vmem>>, %arg6: memref<16x128xf32, #tpu.memory_space<vmem>>) attributes {dimension_semantics = [#tpu.dimension_semantics<parallel>, #tpu.dimension_semantics<arbitrary>], iteration_bounds = array<i64: 1, 1>, scalar_prefetch = 0 : i64, scratch_operands = 1 : i64, tpu.core_type = #tpu.core_type<tc>, window_params = [{transform_indices = @transform_0, window_bounds = array<i64: 16, 128>}, {transform_indices = @transform_1, window_bounds = array<i64: 128, 128>}, {transform_indices = @transform_2, window_bounds = array<i64: 128, 128>}, {transform_indices = @transform_3, window_bounds = array<i64: 16, 128>}]} {
    %c0_i32 = arith.constant 0 : i32
    %0 = arith.cmpi eq, %arg1, %c0_i32 : i32
    %1 = arith.extui %0 : i1 to i32
    %c0_i32_0 = arith.constant 0 : i32
    %2 = arith.cmpi ne, %1, %c0_i32_0 : i32
    scf.if %2 {
      %cst_16 = arith.constant 0.000000e+00 : f32
      %22 = vector.broadcast %cst_16 : f32 to vector<16x128xf32>
      %c0_17 = arith.constant 0 : index
      %c0_18 = arith.constant 0 : index
      %23 = vector.load %arg6[%c0_17, %c0_18] : memref<16x128xf32, #tpu.memory_space<vmem>>, vector<16x128xf32>
      tpu.vector_store %arg6[%c0_17, %c0_18], %22 {strides = array<i32>} : memref<16x128xf32, #tpu.memory_space<vmem>>, vector<16x128xf32>,
    } else {
    }
    %c0 = arith.constant 0 : index
    %c0_1 = arith.constant 0 : index
    %3 = vector.load %arg2[%c0, %c0_1] : memref<16x128xf32, #tpu.memory_space<vmem>>, vector<16x128xf32>
    %c0_2 = arith.constant 0 : index
    %c0_3 = arith.constant 0 : index
    %4 = vector.load %arg3[%c0_2, %c0_3] : memref<128x128xf32, #tpu.memory_space<vmem>>, vector<128x128xf32>
    %cst = arith.constant dense<0.000000e+00> : vector<16x128xf32>
    %5 = tpu.matmul %3, %4, %cst {dimension_numbers = #tpu.dot_dimension_numbers<[1], [0], [0], [1], [0, 0, 1, 1], [], []>} : vector<16x128xf32>, vector<128x128xf32>, vector<16x128xf32> -> vector<16x128xf32>
    %cst_4 = arith.constant 5.000000e-01 : f32
    %6 = vector.broadcast %cst_4 : f32 to vector<16x128xf32>
    %7 = arith.mulf %6, %5 : vector<16x128xf32>
    %cst_5 = arith.constant 0.707106769 : f32
    %8 = vector.broadcast %cst_5 : f32 to vector<16x128xf32>
    %9 = arith.mulf %5, %8 : vector<16x128xf32>
    %10 = math.erf %9 : vector<16x128xf32>
    %cst_6 = arith.constant 1.000000e+00 : f32
    %11 = vector.broadcast %cst_6 : f32 to vector<16x128xf32>
    %12 = arith.addf %11, %10 : vector<16x128xf32>
    %13 = arith.mulf %7, %12 : vector<16x128xf32>
    %c0_7 = arith.constant 0 : index
    %c0_8 = arith.constant 0 : index
    %14 = vector.load %arg6[%c0_7, %c0_8] : memref<16x128xf32, #tpu.memory_space<vmem>>, vector<16x128xf32>
    %c0_9 = arith.constant 0 : index
    %c0_10 = arith.constant 0 : index
    %15 = vector.load %arg4[%c0_9, %c0_10] : memref<128x128xf32, #tpu.memory_space<vmem>>, vector<128x128xf32>
    %cst_11 = arith.constant dense<0.000000e+00> : vector<16x128xf32>
    %16 = tpu.matmul %13, %15, %cst_11 {dimension_numbers = #tpu.dot_dimension_numbers<[1], [0], [0], [1], [0, 0, 1, 1], [], []>} : vector<16x128xf32>, vector<128x128xf32>, vector<16x128xf32> -> vector<16x128xf32>
    %17 = arith.addf %14, %16 : vector<16x128xf32>
    %c0_12 = arith.constant 0 : index
    %c0_13 = arith.constant 0 : index
    %18 = vector.load %arg6[%c0_12, %c0_13] : memref<16x128xf32, #tpu.memory_space<vmem>>, vector<16x128xf32>
    tpu.vector_store %arg6[%c0_12, %c0_13], %17 {strides = array<i32>} : memref<16x128xf32, #tpu.memory_space<vmem>>, vector<16x128xf32>,
    %c0_i32_14 = arith.constant 0 : i32
    %19 = arith.cmpi eq, %arg1, %c0_i32_14 : i32
    %20 = arith.extui %19 : i1 to i32
    %c0_i32_15 = arith.constant 0 : i32
    %21 = arith.cmpi ne, %20, %c0_i32_15 : i32
    scf.if %21 {
      %c0_16 = arith.constant 0 : index
      %c0_17 = arith.constant 0 : index
      %22 = vector.load %arg6[%c0_16, %c0_17] : memref<16x128xf32, #tpu.memory_space<vmem>>, vector<16x128xf32>
      %c0_18 = arith.constant 0 : index
      %c0_19 = arith.constant 0 : index
      %23 = vector.load %arg5[%c0_18, %c0_19] : memref<16x128xf32, #tpu.memory_space<vmem>>, vector<16x128xf32>
      tpu.vector_store %arg5[%c0_18, %c0_19], %22 {strides = array<i32>} : memref<16x128xf32, #tpu.memory_space<vmem>>, vector<16x128xf32>,
    } else {
    }
    return
  }
  func.func @transform_0(%arg0: i32, %arg1: i32) -> (i32, i32) {
    %c0_i32 = arith.constant 0 : i32
    %c0_i32_0 = arith.constant 0 : i32
    return %arg0, %c0_i32 : i32, i32
  }
  func.func @transform_1(%arg0: i32, %arg1: i32) -> (i32, i32) {
    %c0_i32 = arith.constant 0 : i32
    %c0_i32_0 = arith.constant 0 : i32
    return %c0_i32, %arg1 : i32, i32
  }
  func.func @transform_2(%arg0: i32, %arg1: i32) -> (i32, i32) {
    %c0_i32 = arith.constant 0 : i32
    %c0_i32_0 = arith.constant 0 : i32
    return %arg1, %c0_i32 : i32, i32
  }
  func.func @transform_3(%arg0: i32, %arg1: i32) -> (i32, i32) {
    %c0_i32 = arith.constant 0 : i32
    %c0_i32_0 = arith.constant 0 : i32
    return %arg0, %c0_i32 : i32, i32
  }
}

</mosaic_0001>

<llo_original>
// kernel: mlp_forward.1
$region0: #{mlp_forward.1}
  #allocation0 [shape = 'u32[]', space=smem, size = 0x4, offset = 0x4, fixed_abs, tag = 'smem constant byte address 0x4 - core index']
  #allocation1 [shape = 'u32[144,128]{1,0:T(1,128)}', space=vmem, size = 0x12000, scoped, tag = 'internal scratch']
  #allocation2 [shape = 'f32[16,128]{1,0:T(8,128)}', space=vmem, size = 0x2000, scoped, tag = 'scratch operand']
  %s0 = inlined_call_operand.vmem [shape: f32[16,128], index: 0, kind: input, shape index: {}]
  %s1 = inlined_call_operand.vmem [shape: f32[128,128], index: 1, kind: input, shape index: {}]
  %s2 = inlined_call_operand.vmem [shape: f32[128,128], index: 2, kind: input, shape index: {}]
  %s3 = inlined_call_operand.vmem [shape: f32[16,128], index: 3, kind: output, shape index: {}]
  %s4 = sld [smem:[#allocation0]]
  $region30: #{mlp_forward.1} parent=0
    _
  %s6 = ssub.s32 1, %s4
  %s7 = scalar_select 0, %s6, %s4
  // Predicated region
  $region2: #{mlp_forward.1} parent=0 // pred_check
    _
  $region3: #{mlp_forward.1} parent=0 // pred_check_branch
    %9 = sbr.rel (0) target = $region5
  $region4: #{mlp_forward.1} parent=0 // pred_region
    _
  $region5: #{mlp_forward.1} parent=0 // pred_fallthru
    _
  // Predicated region
  $region6: #{mlp_forward.1} parent=0 // pred_check
    _
  $region7: #{mlp_forward.1} parent=0 // pred_check_branch
    %11 = sbr.rel (0) target = $region9
  $region8: #{mlp_forward.1} parent=0 // pred_region
    _
  $region9: #{mlp_forward.1} parent=0 // pred_fallthru
    _
  // Predicated region
  $region10: #{mlp_forward.1} parent=0 // pred_check
    _
  $region11: #{mlp_forward.1} parent=0 // pred_check_branch
    %13 = sbr.rel (0) target = $region13
  $region12: #{mlp_forward.1} parent=0 // pred_region
    _
  $region13: #{mlp_forward.1} parent=0 // pred_fallthru
    _
  %p14 = scmp.eq.s32.totalorder 0, 0
  // Predicated region
  $region14: #{mlp_forward.1} parent=0 // pred_check
    %p15 = pneg %p14
  $region15: #{mlp_forward.1} parent=0 // pred_check_branch
    %17 = sbr.rel (%p15) target = $region17
  $region16: #{mlp_forward.1} parent=0 // pred_region
    %18 = vst [vmem:[#allocation2] sm:$0xff] 0.0
    %19 = vst [vmem:[#allocation2 + $0x8] sm:$0xff] 0.0
  $region17: #{mlp_forward.1} parent=0 // pred_fallthru
    _
  %v20 = vld [vmem:[%s0] sm:$0xff]
  %v21 = vld [vmem:[%s0 + $0x8] sm:$0xff]
  %v22 = vld [vmem:[%s1] sm:$0xff]
  %v23 = vld [vmem:[%s1 + $0x8] sm:$0xff]
  %v24 = vld [vmem:[%s1 + $0x10] sm:$0xff]
  %v25 = vld [vmem:[%s1 + $0x18] sm:$0xff]
  %v26 = vld [vmem:[%s1 + $0x20] sm:$0xff]
  %v27 = vld [vmem:[%s1 + $0x28] sm:$0xff]
  %v28 = vld [vmem:[%s1 + $0x30] sm:$0xff]
  %v29 = vld [vmem:[%s1 + $0x38] sm:$0xff]
  %v30 = vld [vmem:[%s1 + $0x40] sm:$0xff]
  %v31 = vld [vmem:[%s1 + $0x48] sm:$0xff]
  %v32 = vld [vmem:[%s1 + $0x50] sm:$0xff]
  %v33 = vld [vmem:[%s1 + $0x58] sm:$0xff]
  %v34 = vld [vmem:[%s1 + $0x60] sm:$0xff]
  %v35 = vld [vmem:[%s1 + $0x68] sm:$0xff]
  %v36 = vld [vmem:[%s1 + $0x70] sm:$0xff]
  %v37 = vld [vmem:[%s1 + $0x78] sm:$0xff]
  %38 = vmatprep.subr.mxu0 0.0
  %39 = vmatpush1.msra.mxu0 %v22
  %40 = vmatprep.subr.mxu0 0.0
  %41 = vmatpush1.msra.mxu0 %v23
  %42 = vmatprep.subr.mxu0 0.0
  %43 = vmatpush1.msra.mxu0 %v24
  %44 = vmatprep.subr.mxu0 0.0
  %45 = vmatpush1.msra.mxu0 %v25
  %46 = vmatprep.subr.mxu0 0.0
  %47 = vmatpush1.msra.mxu0 %v26
  %48 = vmatprep.subr.mxu0 0.0
  %49 = vmatpush1.msra.mxu0 %v27
  %50 = vmatprep.subr.mxu0 0.0
  %51 = vmatpush1.msra.mxu0 %v28
  %52 = vmatprep.subr.mxu0 0.0
  %53 = vmatpush1.msra.mxu0 %v29
  %54 = vmatprep.subr.mxu0 0.0
  %55 = vmatpush1.msra.mxu0 %v30
  %56 = vmatprep.subr.mxu0 0.0
  %57 = vmatpush1.msra.mxu0 %v31
  %58 = vmatprep.subr.mxu0 0.0
  %59 = vmatpush1.msra.mxu0 %v32
  %60 = vmatprep.subr.mxu0 0.0
  %61 = vmatpush1.msra.mxu0 %v33
  %62 = vmatprep.subr.mxu0 0.0
  %63 = vmatpush1.msra.mxu0 %v34
  %64 = vmatprep.subr.mxu0 0.0
  %65 = vmatpush1.msra.mxu0 %v35
  %66 = vmatprep.subr.mxu0 0.0
  %67 = vmatpush1.msra.mxu0 %v36
  %68 = vmatprep.subr.mxu0 0.0
  %69 = vmatpush1.msra.mxu0 %v37
  %70 = vmatprep.subr.mxu0 0.0
  %71 = vmatpush1.msra.mxu0 0.0
  %72 = vmatprep.subr.mxu0 0.0
  %73 = vmatpush1.msra.mxu0 0.0
  %74 = vmatprep.subr.mxu0 0.0
  %75 = vmatpush1.msra.mxu0 0.0
  %76 = vmatprep.subr.mxu0 0.0
  %77 = vmatpush1.msra.mxu0 0.0
  %78 = vmatprep.subr.mxu0 0.0
  %79 = vmatpush1.msra.mxu0 0.0
  %80 = vmatprep.subr.mxu0 0.0
  %81 = vmatpush1.msra.mxu0 0.0
  %82 = vmatprep.subr.mxu0 0.0
  %83 = vmatpush1.msra.mxu0 0.0
  %84 = vmatprep.subr.mxu0 0.0
  %85 = vmatpush1.msra.mxu0 0.0
  %86 = vmatprep.subr.mxu0 0.0
  %87 = vmatpush1.msra.mxu0 0.0
  %88 = vmatprep.subr.mxu0 0.0
  %89 = vmatpush1.msra.mxu0 0.0
  %90 = vmatprep.subr.mxu0 0.0
  %91 = vmatpush1.msra.mxu0 0.0
  %92 = vmatprep.subr.mxu0 0.0
  %93 = vmatpush1.msra.mxu0 0.0
  %94 = vmatprep.subr.mxu0 0.0
  %95 = vmatpush1.msra.mxu0 0.0
  %96 = vmatprep.subr.mxu0 0.0
  %97 = vmatpush1.msra.mxu0 0.0
  %98 = vmatprep.subr.mxu0 0.0
  %99 = vmatpush1.msra.mxu0 0.0
  %100 = vmatprep.subr.mxu0 0.0
  %101 = vmatpush1.msra.mxu0 0.0
  %102 = vmatprep.mubr.f32.mxu0 0.0
  %103 = vmatmul.mubr.f32.gmra.mrb[0].mxu0 %v20
  %v104 = vpop.f32.mrb[0].mxu0
  %v105 = vadd.f32 0.0, %v104
  %v106 = vpop.f32.mrb[0].mxu0
  %107 = vmatprep.mubr.f32.mxu0 0.0
  %108 = vmatmul.mubr.f32.gmra.mrb[0].mxu0 %v21
  %v109 = vpop.f32.mrb[0].mxu0
  %v110 = vadd.f32 0.0, %v109
  %v111 = vpop.f32.mrb[0].mxu0
  %112 = vdwg.mxu0
  %v113 = vmul.f32 %v105, 0.5
  %v114 = vmul.f32 %v110, 0.5
  %v115 = vmul.f32 %v105, 0.70710677
  %v116 = vmul.f32 %v110, 0.70710677
  %v117 = verf.f32.pop %v115
  %v118 = verf.f32.pop %v116
  %v119 = vadd.f32 %v117, 1.0
  %v120 = vadd.f32 %v118, 1.0
  %v121 = vmul.f32 %v113, %v119
  %v122 = vmul.f32 %v114, %v120
  %v123 = vld [vmem:[#allocation2] sm:$0xff]
  %v124 = vld [vmem:[#allocation2 + $0x8] sm:$0xff]
  %v125 = vld [vmem:[%s2] sm:$0xff]
  %v126 = vld [vmem:[%s2 + $0x8] sm:$0xff]
  %v127 = vld [vmem:[%s2 + $0x10] sm:$0xff]
  %v128 = vld [vmem:[%s2 + $0x18] sm:$0xff]
  %v129 = vld [vmem:[%s2 + $0x20] sm:$0xff]
  %v130 = vld [vmem:[%s2 + $0x28] sm:$0xff]
  %v131 = vld [vmem:[%s2 + $0x30] sm:$0xff]
  %v132 = vld [vmem:[%s2 + $0x38] sm:$0xff]
  %v133 = vld [vmem:[%s2 + $0x40] sm:$0xff]
  %v134 = vld [vmem:[%s2 + $0x48] sm:$0xff]
  %v135 = vld [vmem:[%s2 + $0x50] sm:$0xff]
  %v136 = vld [vmem:[%s2 + $0x58] sm:$0xff]
  %v137 = vld [vmem:[%s2 + $0x60] sm:$0xff]
  %v138 = vld [vmem:[%s2 + $0x68] sm:$0xff]
  %v139 = vld [vmem:[%s2 + $0x70] sm:$0xff]
  %v140 = vld [vmem:[%s2 + $0x78] sm:$0xff]
  %141 = vmatprep.subr.mxu0 0.0
  %142 = vmatpush1.msra.mxu0 %v125
  %143 = vmatprep.subr.mxu0 0.0
  %144 = vmatpush1.msra.mxu0 %v126
  %145 = vmatprep.subr.mxu0 0.0
  %146 = vmatpush1.msra.mxu0 %v127
  %147 = vmatprep.subr.mxu0 0.0
  %148 = vmatpush1.msra.mxu0 %v128
  %149 = vmatprep.subr.mxu0 0.0
  %150 = vmatpush1.msra.mxu0 %v129
  %151 = vmatprep.subr.mxu0 0.0
  %152 = vmatpush1.msra.mxu0 %v130
  %153 = vmatprep.subr.mxu0 0.0
  %154 = vmatpush1.msra.mxu0 %v131
  %155 = vmatprep.subr.mxu0 0.0
  %156 = vmatpush1.msra.mxu0 %v132
  %157 = vmatprep.subr.mxu0 0.0
  %158 = vmatpush1.msra.mxu0 %v133
  %159 = vmatprep.subr.mxu0 0.0
  %160 = vmatpush1.msra.mxu0 %v134
  %161 = vmatprep.subr.mxu0 0.0
  %162 = vmatpush1.msra.mxu0 %v135
  %163 = vmatprep.subr.mxu0 0.0
  %164 = vmatpush1.msra.mxu0 %v136
  %165 = vmatprep.subr.mxu0 0.0
  %166 = vmatpush1.msra.mxu0 %v137
  %167 = vmatprep.subr.mxu0 0.0
  %168 = vmatpush1.msra.mxu0 %v138
  %169 = vmatprep.subr.mxu0 0.0
  %170 = vmatpush1.msra.mxu0 %v139
  %171 = vmatprep.subr.mxu0 0.0
  %172 = vmatpush1.msra.mxu0 %v140
  %173 = vmatprep.subr.mxu0 0.0
  %174 = vmatpush1.msra.mxu0 0.0
  %175 = vmatprep.subr.mxu0 0.0
  %176 = vmatpush1.msra.mxu0 0.0
  %177 = vmatprep.subr.mxu0 0.0
  %178 = vmatpush1.msra.mxu0 0.0
  %179 = vmatprep.subr.mxu0 0.0
  %180 = vmatpush1.msra.mxu0 0.0
  %181 = vmatprep.subr.mxu0 0.0
  %182 = vmatpush1.msra.mxu0 0.0
  %183 = vmatprep.subr.mxu0 0.0
  %184 = vmatpush1.msra.mxu0 0.0
  %185 = vmatprep.subr.mxu0 0.0
  %186 = vmatpush1.msra.mxu0 0.0
  %187 = vmatprep.subr.mxu0 0.0
  %188 = vmatpush1.msra.mxu0 0.0
  %189 = vmatprep.subr.mxu0 0.0
  %190 = vmatpush1.msra.mxu0 0.0
  %191 = vmatprep.subr.mxu0 0.0
  %192 = vmatpush1.msra.mxu0 0.0
  %193 = vmatprep.subr.mxu0 0.0
  %194 = vmatpush1.msra.mxu0 0.0
  %195 = vmatprep.subr.mxu0 0.0
  %196 = vmatpush1.msra.mxu0 0.0
  %197 = vmatprep.subr.mxu0 0.0
  %198 = vmatpush1.msra.mxu0 0.0
  %199 = vmatprep.subr.mxu0 0.0
  %200 = vmatpush1.msra.mxu0 0.0
  %201 = vmatprep.subr.mxu0 0.0
  %202 = vmatpush1.msra.mxu0 0.0
  %203 = vmatprep.subr.mxu0 0.0
  %204 = vmatpush1.msra.mxu0 0.0
  %205 = vmatprep.mubr.f32.mxu0 0.0
  %206 = vmatmul.mubr.f32.gmra.mrb[0].mxu0 %v121
  %v207 = vpop.f32.mrb[0].mxu0
  %v208 = vadd.f32 0.0, %v207
  %v209 = vpop.f32.mrb[0].mxu0
  %210 = vmatprep.mubr.f32.mxu0 0.0
  %211 = vmatmul.mubr.f32.gmra.mrb[0].mxu0 %v122
  %v212 = vpop.f32.mrb[0].mxu0
  %v213 = vadd.f32 0.0, %v212
  %v214 = vpop.f32.mrb[0].mxu0
  %215 = vdwg.mxu0
  %v216 = vadd.f32 %v123, %v208
  %v217 = vadd.f32 %v124, %v213
  %218 = vst [vmem:[#allocation2] sm:$0xff] %v216
  %219 = vst [vmem:[#allocation2 + $0x8] sm:$0xff] %v217
  // Predicated region
  $region18: #{mlp_forward.1} parent=0 // pred_check
    %p220 = pneg %p14
  $region19: #{mlp_forward.1} parent=0 // pred_check_branch
    %222 = sbr.rel (%p220) target = $region21
  $region20: #{mlp_forward.1} parent=0 // pred_region
    %v223 = vld [vmem:[#allocation2] sm:$0xff]
    %v224 = vld [vmem:[#allocation2 + $0x8] sm:$0xff]
    %225 = vst [vmem:[%s3] sm:$0xff] %v223
    %226 = vst [vmem:[%s3 + $0x8] sm:$0xff] %v224
  $region21: #{mlp_forward.1} parent=0 // pred_fallthru
    _
  // Predicated region
  $region22: #{mlp_forward.1} parent=0 // pred_check
    _
  $region23: #{mlp_forward.1} parent=0 // pred_check_branch
    %228 = sbr.rel (0) target = $region25
  $region24: #{mlp_forward.1} parent=0 // pred_region
    _
  $region25: #{mlp_forward.1} parent=0 // pred_fallthru
    _
  // Predicated region
  $region26: #{mlp_forward.1} parent=0 // pred_check
    _
  $region27: #{mlp_forward.1} parent=0 // pred_check_branch
    %230 = sbr.rel (0) target = $region29
  $region28: #{mlp_forward.1} parent=0 // pred_region
    _
  $region29: #{mlp_forward.1} parent=0 // pred_fallthru
    _

</llo_original>
